<compile_context>
chip_gen: v7x
topology: tpu7x:2x2x1
jax: 0.10.0
libtpu: 0.0.40
codegen_flags: <defaults>
</compile_context>

<pallas_src>
import functools

import jax
import jax.numpy as jnp
from jax.experimental import pallas as pl
from jax.experimental.pallas import tpu as pltpu


def _smoothed_ce_kernel(x_ref, tgt_ref, out_ref, m_ref, l_ref, wsum_ref, *,
                        fill, confidence, classes, tile_c):
    """One (row-tile, class-tile) grid step of the online label-smoothed CE."""
    k = pl.program_id(1)  # class-tile index (last grid axis -> innermost loop)

    @pl.when(k == 0)
    def _init():
        m_ref[...] = jnp.full_like(m_ref, -jnp.inf)
        l_ref[...] = jnp.zeros_like(l_ref)
        wsum_ref[...] = jnp.zeros_like(wsum_ref)

    # Cast to f32 in-kernel so the HBM read stays in the input's native dtype
    # (bf16 inputs halve bandwidth on the HBM-bound v5e/v6e path).
    x = x_ref[...].astype(jnp.float32)                         # (TILE_N, TILE_C)
    tn, tc = x.shape

    # Global class index of each column in this tile; smoothed weight per element.
    col = k * tile_c + jax.lax.broadcasted_iota(jnp.int32, (tn, tc), 1)
    tgt = tgt_ref[...]                                          # (TILE_N, 1) int32
    w = jnp.where(col == tgt, confidence, fill)                 # (TILE_N, TILE_C) f32

    if classes % tile_c != 0:
        # Last class tile reads past C: mask padded columns (trace-time branch,
        # no cost when C divides evenly).
        valid = col < classes
        w = jnp.where(valid, w, 0.0)
        x_lse = jnp.where(valid, x, -jnp.inf)
        x = jnp.where(valid, x, 0.0)
    else:
        x_lse = x

    # Weighted raw-logit sum (independent of the softmax shift) -> one reduction.
    wsum_ref[...] += jnp.sum(w * x, axis=-1, keepdims=True)

    # Online logsumexp over class tiles.
    m_prev = m_ref[...]
    m_new = jnp.maximum(m_prev, jnp.max(x_lse, axis=-1, keepdims=True))
    l_ref[...] = (l_ref[...] * jnp.exp(m_prev - m_new)
                  + jnp.sum(jnp.exp(x_lse - m_new), axis=-1, keepdims=True))
    m_ref[...] = m_new

    @pl.when(k == pl.num_programs(1) - 1)
    def _finalize():
        # loss_i = (m_i + lse_i) - sum_c w_c * x_ic   (since sum_c w_c == 1)
        out_ref[...] = (m_ref[...] + jnp.log(l_ref[...])) - wsum_ref[...]


def _vmem_capacity_bytes():
    """Physical VMEM per TensorCore; generation-aware with a conservative fallback."""
    try:
        info = pltpu.get_tpu_info()
        cap = getattr(info, "vmem_capacity_bytes", None)
        if cap:
            return int(cap)
    except Exception:
        pass
    return 64 * 1024 * 1024  # v7x per-TC size: safe lower bound for all generations


def _round_up(v, m):
    return -(-v // m) * m


def _pick_tiles(n, c, itemsize, budget_bytes):
    """Choose (TILE_N, TILE_C) so the double-buffered working set fits the budget."""
    gran = {4: 8, 2: 16, 1: 32}.get(itemsize, 8)   # sublane granularity for the input dtype

    # Class tile: whole C when it fits, otherwise a 128-aligned slab (online LSE
    # handles the reduction across class tiles, so vocab-scale C is fine).
    c_tile_max = 2048                               # multiple of 128
    tile_c = c if c <= c_tile_max else c_tile_max

    # Per-row VMEM: double-buffered input block + ~4 live f32-wide temporaries
    # (cast / weight / shifted / exp) + tiny per-row accumulators, labels, output.
    per_row = tile_c * (2 * itemsize + 4 * 4) + 64

    tile_n = max(gran, (budget_bytes // max(per_row, 1)) // gran * gran)
    tile_n = min(tile_n, 2048)                      # amortizes ~0.35us/step well past this
    n_pad = _round_up(n, gran)
    tile_n = min(tile_n, n_pad)

    # Keep >= 2 row tiles when the batch allows it so the "parallel" axis can split
    # across the two TensorCores on v7x (negligible cost on single-TC v5e/v6e).
    if n_pad >= 2 * gran:
        tile_n = min(tile_n, _round_up(pl.cdiv(n, 2), gran))

    return tile_n, tile_c


def smoothed_cross_entropy_loss(pred, labels, *, classes, smoothing=0.0):
    """pred: (N, classes) float (f32/bf16); labels: (N,) int. Returns scalar f32."""
    assert 0.0 <= smoothing < 1.0
    n, c = pred.shape
    assert c == classes
    confidence = 1.0 - float(smoothing)
    fill = float(smoothing) / float(classes - 1) if classes > 1 else 0.0

    itemsize = jnp.dtype(pred.dtype).itemsize

    # Generation-aware scoped-VMEM limit (v7x: ~48 MiB of its 64 MiB; v5e/v6e: 96 MiB
    # of 128 MiB), with headroom left for Mosaic internals when sizing the tiles.
    vmem_cap = _vmem_capacity_bytes()
    vmem_limit = min(vmem_cap * 3 // 4, 96 * 1024 * 1024)
    budget = max(vmem_limit - 8 * 1024 * 1024, 4 * 1024 * 1024)

    tile_n, tile_c = _pick_tiles(n, c, itemsize, budget)
    grid = (pl.cdiv(n, tile_n), pl.cdiv(c, tile_c))

    tgt2d = labels.astype(jnp.int32).reshape(n, 1)
    kernel = functools.partial(_smoothed_ce_kernel, fill=fill, confidence=confidence,
                               classes=classes, tile_c=tile_c)

    # TODO(synk): optional lane-dense output ((1, N) layout or per-tile partial sums)
    # would remove the narrow (TILE_N, 1) masked stores; skipped as low-value vs the
    # class-dim input traffic and to keep the remainder-tile handling trivially safe.
    per_row = pl.pallas_call(
        kernel,
        out_shape=jax.ShapeDtypeStruct((n, 1), jnp.float32),
        grid_spec=pltpu.PrefetchScalarGridSpec(
            num_scalar_prefetch=0,
            grid=grid,
            in_specs=[
                pl.BlockSpec((tile_n, tile_c), lambda i, k: (i, k)),  # pred block
                pl.BlockSpec((tile_n, 1), lambda i, k: (i, 0)),       # labels (reused per k)
            ],
            out_specs=pl.BlockSpec((tile_n, 1), lambda i, k: (i, 0)), # per-row losses
            scratch_shapes=[
                pltpu.VMEM((tile_n, 1), jnp.float32),   # running max  m
                pltpu.VMEM((tile_n, 1), jnp.float32),   # running sum-exp  l
                pltpu.VMEM((tile_n, 1), jnp.float32),   # running weighted logit sum
            ],
        ),
        compiler_params=pltpu.CompilerParams(
            dimension_semantics=("parallel", "arbitrary"),  # rows parallel, classes reduce
            vmem_limit_bytes=int(vmem_limit),
        ),
    )(pred, tgt2d)

    return jnp.mean(per_row)                                   # mean over the batch


def _reference(pred, labels, *, classes, smoothing):
    # Pure-JAX mirror of the PyTorch module, for a sanity check.
    confidence = 1.0 - smoothing
    fill = smoothing / (classes - 1) if classes > 1 else 0.0
    logp = jax.nn.log_softmax(pred.astype(jnp.float32), axis=-1)
    true_dist = jnp.full((pred.shape[0], classes), fill, dtype=jnp.float32)
    true_dist = true_dist.at[jnp.arange(pred.shape[0]), labels].set(confidence)
    return jnp.mean(jnp.sum(-true_dist * logp, axis=-1))


if __name__ == "__main__":
    key = jax.random.PRNGKey(0)
    kx, kt = jax.random.split(key)

    N, CLASSES = 8, 16
    SMOOTHING = 0.1

    pred = jax.random.normal(kx, (N, CLASSES), dtype=jnp.float32)
    labels = jax.random.randint(kt, (N,), 0, CLASSES, dtype=jnp.int32)

    loss = smoothed_cross_entropy_loss(pred, labels, classes=CLASSES, smoothing=SMOOTHING)
    loss = jax.block_until_ready(loss)

    ref = _reference(pred, labels, classes=CLASSES, smoothing=SMOOTHING)
    assert jnp.allclose(loss, ref, rtol=1e-5, atol=1e-6), (loss, ref)

    print("KERNEL_OK")
</pallas_src>

<mosaic_0001>
module attributes {stable_mosaic.version = 11 : i64} {
  func.func @_smoothed_ce_kernel(%arg0: i32, %arg1: i32, %arg2: memref<8x16xf32, #tpu.memory_space<vmem>>, %arg3: memref<8x1xi32, #tpu.memory_space<vmem>>, %arg4: memref<8x1xf32, #tpu.memory_space<vmem>>, %arg5: memref<8x1xf32, #tpu.memory_space<vmem>>, %arg6: memref<8x1xf32, #tpu.memory_space<vmem>>, %arg7: memref<8x1xf32, #tpu.memory_space<vmem>>) attributes {dimension_semantics = [#tpu.dimension_semantics<parallel>, #tpu.dimension_semantics<arbitrary>], iteration_bounds = array<i64: 1, 1>, scalar_prefetch = 0 : i64, scratch_operands = 3 : i64, tpu.core_type = #tpu.core_type<tc>, window_params = [{transform_indices = @transform_0, window_bounds = array<i64: 8, 16>}, {transform_indices = @transform_1, window_bounds = array<i64: 8, 1>}, {transform_indices = @transform_2, window_bounds = array<i64: 8, 1>}]} {
    %c0_i32 = arith.constant 0 : i32
    %0 = arith.cmpi eq, %arg1, %c0_i32 : i32
    %1 = arith.extui %0 : i1 to i32
    %c0_i32_0 = arith.constant 0 : i32
    %2 = arith.cmpi ne, %1, %c0_i32_0 : i32
    scf.if %2 {
      %cst_22 = arith.constant 0xFF800000 : f32
      %39 = vector.broadcast %cst_22 : f32 to vector<8x1xf32>
      %c0_23 = arith.constant 0 : index
      %c0_24 = arith.constant 0 : index
      %40 = vector.load %arg5[%c0_23, %c0_24] : memref<8x1xf32, #tpu.memory_space<vmem>>, vector<8x1xf32>
      tpu.vector_store %arg5[%c0_23, %c0_24], %39 {strides = array<i32>} : memref<8x1xf32, #tpu.memory_space<vmem>>, vector<8x1xf32>,
      %cst_25 = arith.constant 0.000000e+00 : f32
      %41 = vector.broadcast %cst_25 : f32 to vector<8x1xf32>
      %c0_26 = arith.constant 0 : index
      %c0_27 = arith.constant 0 : index
      %42 = vector.load %arg6[%c0_26, %c0_27] : memref<8x1xf32, #tpu.memory_space<vmem>>, vector<8x1xf32>
      tpu.vector_store %arg6[%c0_26, %c0_27], %41 {strides = array<i32>} : memref<8x1xf32, #tpu.memory_space<vmem>>, vector<8x1xf32>,
      %cst_28 = arith.constant 0.000000e+00 : f32
      %43 = vector.broadcast %cst_28 : f32 to vector<8x1xf32>
      %c0_29 = arith.constant 0 : index
      %c0_30 = arith.constant 0 : index
      %44 = vector.load %arg7[%c0_29, %c0_30] : memref<8x1xf32, #tpu.memory_space<vmem>>, vector<8x1xf32>
      tpu.vector_store %arg7[%c0_29, %c0_30], %43 {strides = array<i32>} : memref<8x1xf32, #tpu.memory_space<vmem>>, vector<8x1xf32>,
    } else {
    }
    %c0 = arith.constant 0 : index
    %c0_1 = arith.constant 0 : index
    %3 = vector.load %arg2[%c0, %c0_1] : memref<8x16xf32, #tpu.memory_space<vmem>>, vector<8x16xf32>
    %c16_i32 = arith.constant 16 : i32
    %4 = arith.muli %arg1, %c16_i32 : i32
    %5 = tpu.iota {dimensions = array<i32: 1>} : vector<8x16xi32>
    %6 = vector.broadcast %4 : i32 to vector<8x16xi32>
    %7 = arith.addi %6, %5 : vector<8x16xi32>
    %c0_2 = arith.constant 0 : index
    %c0_3 = arith.constant 0 : index
    %8 = vector.load %arg3[%c0_2, %c0_3] : memref<8x1xi32, #tpu.memory_space<vmem>>, vector<8x1xi32>
    %9 = vector.broadcast %8 : vector<8x1xi32> to vector<8x16xi32>
    %10 = arith.cmpi eq, %7, %9 : vector<8x16xi32>
    %cst = arith.constant 0.899999976 : f32
    %cst_4 = arith.constant 0.00666666683 : f32
    %11 = vector.broadcast %cst : f32 to vector<8x16xf32>
    %12 = vector.broadcast %cst_4 : f32 to vector<8x16xf32>
    %13 = arith.select %10, %11, %12 : vector<8x16xi1>, vector<8x16xf32>
    %c0_5 = arith.constant 0 : index
    %c0_6 = arith.constant 0 : index
    %14 = vector.load %arg7[%c0_5, %c0_6] : memref<8x1xf32, #tpu.memory_space<vmem>>, vector<8x1xf32>
    %15 = arith.mulf %13, %3 : vector<8x16xf32>
    %cst_7 = arith.constant dense<0.000000e+00> : vector<8xf32>
    %16 = vector.multi_reduction <add>, %15, %cst_7 [1] : vector<8x16xf32> to vector<8xf32>
    %17 = vector.shape_cast %16 : vector<8xf32> to vector<8x1xf32>
    %18 = arith.addf %14, %17 : vector<8x1xf32>
    %c0_8 = arith.constant 0 : index
    %c0_9 = arith.constant 0 : index
    %19 = vector.load %arg7[%c0_8, %c0_9] : memref<8x1xf32, #tpu.memory_space<vmem>>, vector<8x1xf32>
    tpu.vector_store %arg7[%c0_8, %c0_9], %18 {strides = array<i32>} : memref<8x1xf32, #tpu.memory_space<vmem>>, vector<8x1xf32>,
    %c0_10 = arith.constant 0 : index
    %c0_11 = arith.constant 0 : index
    %20 = vector.load %arg5[%c0_10, %c0_11] : memref<8x1xf32, #tpu.memory_space<vmem>>, vector<8x1xf32>
    %cst_12 = arith.constant dense<0xFF800000> : vector<8xf32>
    %21 = vector.multi_reduction <maximumf>, %3, %cst_12 [1] : vector<8x16xf32> to vector<8xf32>
    %22 = vector.shape_cast %21 : vector<8xf32> to vector<8x1xf32>
    %23 = arith.maximumf %20, %22 : vector<8x1xf32>
    %c0_13 = arith.constant 0 : index
    %c0_14 = arith.constant 0 : index
    %24 = vector.load %arg6[%c0_13, %c0_14] : memref<8x1xf32, #tpu.memory_space<vmem>>, vector<8x1xf32>
    %25 = arith.subf %20, %23 : vector<8x1xf32>
    %26 = math.exp %25 : vector<8x1xf32>
    %27 = arith.mulf %24, %26 : vector<8x1xf32>
    %28 = vector.broadcast %23 : vector<8x1xf32> to vector<8x16xf32>
    %29 = arith.subf %3, %28 : vector<8x16xf32>
    %30 = math.exp %29 : vector<8x16xf32>
    %cst_15 = arith.constant dense<0.000000e+00> : vector<8xf32>
    %31 = vector.multi_reduction <add>, %30, %cst_15 [1] : vector<8x16xf32> to vector<8xf32>
    %32 = vector.shape_cast %31 : vector<8xf32> to vector<8x1xf32>
    %33 = arith.addf %27, %32 : vector<8x1xf32>
    %c0_16 = arith.constant 0 : index
    %c0_17 = arith.constant 0 : index
    %34 = vector.load %arg6[%c0_16, %c0_17] : memref<8x1xf32, #tpu.memory_space<vmem>>, vector<8x1xf32>
    tpu.vector_store %arg6[%c0_16, %c0_17], %33 {strides = array<i32>} : memref<8x1xf32, #tpu.memory_space<vmem>>, vector<8x1xf32>,
    %c0_18 = arith.constant 0 : index
    %c0_19 = arith.constant 0 : index
    %35 = vector.load %arg5[%c0_18, %c0_19] : memref<8x1xf32, #tpu.memory_space<vmem>>, vector<8x1xf32>
    tpu.vector_store %arg5[%c0_18, %c0_19], %23 {strides = array<i32>} : memref<8x1xf32, #tpu.memory_space<vmem>>, vector<8x1xf32>,
    %c0_i32_20 = arith.constant 0 : i32
    %36 = arith.cmpi eq, %arg1, %c0_i32_20 : i32
    %37 = arith.extui %36 : i1 to i32
    %c0_i32_21 = arith.constant 0 : i32
    %38 = arith.cmpi ne, %37, %c0_i32_21 : i32
    scf.if %38 {
      %c0_22 = arith.constant 0 : index
      %c0_23 = arith.constant 0 : index
      %39 = vector.load %arg5[%c0_22, %c0_23] : memref<8x1xf32, #tpu.memory_space<vmem>>, vector<8x1xf32>
      %c0_24 = arith.constant 0 : index
      %c0_25 = arith.constant 0 : index
      %40 = vector.load %arg6[%c0_24, %c0_25] : memref<8x1xf32, #tpu.memory_space<vmem>>, vector<8x1xf32>
      %41 = math.log %40 : vector<8x1xf32>
      %42 = arith.addf %39, %41 : vector<8x1xf32>
      %c0_26 = arith.constant 0 : index
      %c0_27 = arith.constant 0 : index
      %43 = vector.load %arg7[%c0_26, %c0_27] : memref<8x1xf32, #tpu.memory_space<vmem>>, vector<8x1xf32>
      %44 = arith.subf %42, %43 : vector<8x1xf32>
      %c0_28 = arith.constant 0 : index
      %c0_29 = arith.constant 0 : index
      %45 = vector.load %arg4[%c0_28, %c0_29] : memref<8x1xf32, #tpu.memory_space<vmem>>, vector<8x1xf32>
      tpu.vector_store %arg4[%c0_28, %c0_29], %44 {strides = array<i32>} : memref<8x1xf32, #tpu.memory_space<vmem>>, vector<8x1xf32>,
    } else {
    }
    return
  }
  func.func @transform_0(%arg0: i32, %arg1: i32) -> (i32, i32) {
    %c0_i32 = arith.constant 0 : i32
    return %arg0, %arg1 : i32, i32
  }
  func.func @transform_1(%arg0: i32, %arg1: i32) -> (i32, i32) {
    %c0_i32 = arith.constant 0 : i32
    %c0_i32_0 = arith.constant 0 : i32
    return %arg0, %c0_i32 : i32, i32
  }
  func.func @transform_2(%arg0: i32, %arg1: i32) -> (i32, i32) {
    %c0_i32 = arith.constant 0 : i32
    %c0_i32_0 = arith.constant 0 : i32
    return %arg0, %c0_i32 : i32, i32
  }
}

</mosaic_0001>

<llo_original>
// kernel: tpu_custom_call.1
$region0: #{tpu_custom_call.1}
  #allocation0 [shape = 'u32[]', space=smem, size = 0x4, offset = 0x4, fixed_abs, tag = 'smem constant byte address 0x4 - core index']
  #allocation1 [shape = 'u32[144,128]{1,0:T(1,128)}', space=vmem, size = 0x12000, scoped, tag = 'internal scratch']
  #allocation2 [shape = 'f32[8,1]{1,0:T(8,128)}', space=vmem, size = 0x1000, scoped, tag = 'scratch operand']
  #allocation3 [shape = 'f32[8,1]{1,0:T(8,128)}', space=vmem, size = 0x1000, scoped, tag = 'scratch operand']
  #allocation4 [shape = 'f32[8,1]{1,0:T(8,128)}', space=vmem, size = 0x1000, scoped, tag = 'scratch operand']
  %s0 = inlined_call_operand.vmem [shape: f32[8,16], index: 0, kind: input, shape index: {}]
  %s1 = inlined_call_operand.vmem [shape: s32[8,1], index: 1, kind: input, shape index: {}]
  %s2 = inlined_call_operand.vmem [shape: f32[8,1], index: 2, kind: output, shape index: {}]
  %s3 = sld [smem:[#allocation0]]
  $region26: #{tpu_custom_call.1} parent=0
    _
  %s5 = ssub.s32 1, %s3
  %s6 = scalar_select 0, %s5, %s3
  // Predicated region
  $region2: #{tpu_custom_call.1} parent=0 // pred_check
    _
  $region3: #{tpu_custom_call.1} parent=0 // pred_check_branch
    %8 = sbr.rel (0) target = $region5
  $region4: #{tpu_custom_call.1} parent=0 // pred_region
    _
  $region5: #{tpu_custom_call.1} parent=0 // pred_fallthru
    _
  // Predicated region
  $region6: #{tpu_custom_call.1} parent=0 // pred_check
    _
  $region7: #{tpu_custom_call.1} parent=0 // pred_check_branch
    %10 = sbr.rel (0) target = $region9
  $region8: #{tpu_custom_call.1} parent=0 // pred_region
    _
  $region9: #{tpu_custom_call.1} parent=0 // pred_fallthru
    _
  %p11 = scmp.eq.s32.totalorder 0, 0
  // Predicated region
  $region10: #{tpu_custom_call.1} parent=0 // pred_check
    %p12 = pneg %p11
  $region11: #{tpu_custom_call.1} parent=0 // pred_check_branch
    %14 = sbr.rel (%p12) target = $region13
  $region12: #{tpu_custom_call.1} parent=0 // pred_region
    %vm15 = vcmask 7168
    %16 = vst.msk [vmem:[#allocation2] sm:$0xff] %vm15, -inf
    %17 = vst.msk [vmem:[#allocation3] sm:$0xff] %vm15, 0.0
    %18 = vst.msk [vmem:[#allocation4] sm:$0xff] %vm15, 0.0
  $region13: #{tpu_custom_call.1} parent=0 // pred_fallthru
    _
  %v19 = vld [vmem:[%s0] sm:$0xff]
  %s20 = smul.u32 0, 16
  %v21 = vlaneseq
  %v22 = vand.u32 %v21, 127
  %v23 = vstv %s20
  %v24 = vadd.s32 %v23, %v22
  %v25 = vld [vmem:[%s1] sm:$0xff]
  %26 = vset.pattern.permute.xlu0 0
  %27 = vperm.xlu0 %26, %v25
  %v28 = vpop.permute.xlu0 %27
  %vm29 = vcmp.eq.s32.totalorder %v24, %v28
  %v30 = vsel %vm29, 0.9, 0.006666667
  %v31 = vld [vmem:[#allocation4] sm:$0xff]
  %v32 = vmul.f32 %v30, %v19
  %vm33 = vcmask 130048
  %v34 = vsel %vm33, %v32, 0.0
  %35 = vadd.xlane.f32.xlu0 %v34
  %v36 = vpop.xlane.xlu0 %35
  %v37 = vadd.f32 %v31, %v36
  %vm38 = vcmask 7168
  %39 = vst.msk [vmem:[#allocation4] sm:$0xff] %vm38, %v37
  %v40 = vld [vmem:[#allocation2] sm:$0xff]
  %v41 = vsel %vm33, %v19, -inf
  %42 = vmax.xlane.f32.xlu0 %v41
  %v43 = vpop.xlane.xlu0 %42
  %v44 = vmax.f32 %v40, %v43
  %v45 = vld [vmem:[#allocation3] sm:$0xff]
  %v46 = vsub.f32 %v40, %v44
  %v47 = vmul.f32 %v46, 1.442695
  %v48 = vpow.pop %v47
  %v49 = vmul.f32 %v45, %v48
  %51 = vset.pattern.permute.xlu0 0
  %52 = vperm.xlu0 %51, %v44
  %v53 = vpop.permute.xlu0 %52
  %v55 = vsub.f32 %v19, %v53
  %v56 = vmul.f32 %v55, 1.442695
  %v57 = vpow.pop %v56
  %v58 = vsel %vm33, %v57, 0.0
  %59 = vadd.xlane.f32.xlu0 %v58
  %v60 = vpop.xlane.xlu0 %59
  %v61 = vadd.f32 %v49, %v60
  %62 = vst.msk [vmem:[#allocation3] sm:$0xff] %vm38, %v61
  %63 = vst.msk [vmem:[#allocation2] sm:$0xff] %vm38, %v44
  // Predicated region
  $region14: #{tpu_custom_call.1} parent=0 // pred_check
    %p64 = pneg %p11
  $region15: #{tpu_custom_call.1} parent=0 // pred_check_branch
    %66 = sbr.rel (%p64) target = $region17
  $region16: #{tpu_custom_call.1} parent=0 // pred_region
    %v67 = vld [vmem:[#allocation2] sm:$0xff]
    %v68 = vld [vmem:[#allocation3] sm:$0xff]
    %v69 = vlog2.pop %v68
    %v70 = vmul.f32 %v69, 0.6931472
    %v71 = vadd.f32 %v67, %v70
    %v72 = vld [vmem:[#allocation4] sm:$0xff]
    %v73 = vsub.f32 %v71, %v72
    %74 = vst.msk [vmem:[%s2] sm:$0xff] %vm38, %v73
  $region17: #{tpu_custom_call.1} parent=0 // pred_fallthru
    _
  // Predicated region
  $region18: #{tpu_custom_call.1} parent=0 // pred_check
    _
  $region19: #{tpu_custom_call.1} parent=0 // pred_check_branch
    %76 = sbr.rel (0) target = $region21
  $region20: #{tpu_custom_call.1} parent=0 // pred_region
    _
  $region21: #{tpu_custom_call.1} parent=0 // pred_fallthru
    _
  // Predicated region
  $region22: #{tpu_custom_call.1} parent=0 // pred_check
    _
  $region23: #{tpu_custom_call.1} parent=0 // pred_check_branch
    %78 = sbr.rel (0) target = $region25
  $region24: #{tpu_custom_call.1} parent=0 // pred_region
    _
  $region25: #{tpu_custom_call.1} parent=0 // pred_fallthru
    _

</llo_original>
